<compile_context>
chip_gen: v7x
topology: tpu7x:2x2x1
jax: 0.10.0
libtpu: 0.0.40
codegen_flags: <defaults>
</compile_context>

<pallas_src>
import functools

import jax
import jax.numpy as jnp
from jax.experimental import pallas as pl
from jax.experimental.pallas import tpu as pltpu

_LANE = 128      # lane tile / padded feature width
_SUB = 8         # f32 sublane tile
_MAX_TB = 256    # batch tile for large batches
_NEG = -1e30     # bias masking padded logit columns out of the softmax


def _round_up(v, m):
    return ((v + m - 1) // m) * m


def _ffnet_kernel(x_ref, noise_ref, w0_ref, w_ref, b_ref, probs_ref, misc_ref):
    # Layer 1: x (TB, d_in) @ w0 (d_in, D) + b0, ReLU.
    h = jnp.dot(x_ref[...], w0_ref[...], preferred_element_type=jnp.float32)
    h = jnp.maximum(h + b_ref[0], 0.0)

    # Layers 2..3: Linear + ReLU (weights zero-padded to (D, D)).
    for l in range(2):
        h = jnp.dot(h, w_ref[l], preferred_element_type=jnp.float32)
        h = jnp.maximum(h + b_ref[l + 1], 0.0)

    # Layer 4: Linear.  Padded output columns get bias -1e30 -> exp underflows to 0.
    logits = jnp.dot(h, w_ref[2], preferred_element_type=jnp.float32) + b_ref[3]

    # Numerically stable softmax / log-softmax over the last dim.
    m = jnp.max(logits, axis=-1, keepdims=True)
    shifted = logits - m
    e = jnp.exp(shifted)
    s = jnp.sum(e, axis=-1, keepdims=True)
    probs_ref[...] = e / s                      # exact normalization
    log_probs = shifted - jnp.log(s)

    # Fused categorical sampling via exponential race:
    #   winner = argmin_i( E_i / p_i ), scale-invariant -> use unnormalized e.
    # Padded columns have e == 0 -> race time +inf -> never selected.
    E = noise_ref[...]                          # i.i.d. Exp(1), > 0
    race = jnp.where(e > 0.0, E / e, jnp.inf)
    col = jax.lax.broadcasted_iota(jnp.int32, race.shape, 1)
    best = jnp.min(race, axis=-1, keepdims=True)
    action = jnp.min(jnp.where(race == best, col, race.shape[-1]),
                     axis=-1, keepdims=True)                     # (TB, 1) int32
    logp = jnp.sum(jnp.where(col == action, log_probs, 0.0),
                   axis=-1, keepdims=True)                       # (TB, 1) f32

    # One lane-dense misc output: col 0 = action (exact small int in f32),
    # col 1 = log_prob, rest 0.
    out_col = jax.lax.broadcasted_iota(jnp.int32, misc_ref.shape, 1)
    misc_ref[...] = jnp.where(out_col == 0, action.astype(jnp.float32),
                              jnp.where(out_col == 1, logp, 0.0))


@functools.partial(jax.jit, static_argnames=("num_out",))
def linear_ffnet_forward(x, key, w0, w_slab, b_slab, *, num_out):
    """x: (B, input_vector_size). Returns (probs (B, num_out), action (B,) i32, log_prob (B,) f32)."""
    B, d_in = x.shape
    D = w_slab.shape[-1]

    B_pad = _round_up(B, _SUB)
    if B_pad <= 2 * _MAX_TB:
        TB = B_pad                       # single tile covering the whole (small) batch
    else:
        TB = _MAX_TB
        B_pad = _round_up(B, TB)
    grid = (B_pad // TB,)

    # Pad ONLY the batch dim (cheap); the feature dim keeps its real width.
    x_p = jnp.pad(x.astype(jnp.float32), ((0, B_pad - B), (0, 0)))
    # Exp(1) noise for the exponential-race sampler (generated off-chip so the
    # kernel needs no on-chip PRNG; fused by XLA into the same dispatch).
    noise = jax.random.exponential(key, (B_pad, D), dtype=jnp.float32)

    flops = 2 * B_pad * (d_in * D + 3 * D * D)
    transcendentals = B_pad * (D + 1)                     # exp per element + log per row
    bytes_accessed = 4 * (x_p.size + noise.size + w0.size + w_slab.size
                          + b_slab.size + B_pad * (D + _LANE))

    probs_p, misc_p = pl.pallas_call(
        _ffnet_kernel,
        out_shape=(
            jax.ShapeDtypeStruct((B_pad, D), jnp.float32),
            jax.ShapeDtypeStruct((B_pad, _LANE), jnp.float32),
        ),
        grid=grid,
        in_specs=[
            pl.BlockSpec((TB, d_in), lambda i: (i, 0)),       # x tile (full feature width)
            pl.BlockSpec((TB, D), lambda i: (i, 0)),          # Exp(1) noise tile
            pl.BlockSpec((d_in, D), lambda i: (0, 0)),        # layer-1 weight: resident
            pl.BlockSpec((3, D, D), lambda i: (0, 0, 0)),     # layers 2-4 weights: resident
            pl.BlockSpec((4, 1, D), lambda i: (0, 0, 0)),     # biases: resident
        ],
        out_specs=[
            pl.BlockSpec((TB, D), lambda i: (i, 0)),          # probs (lane-dense, D=128)
            pl.BlockSpec((TB, _LANE), lambda i: (i, 0)),      # merged action/log_prob
        ],
        compiler_params=pltpu.CompilerParams(dimension_semantics=("parallel",)),
        cost_estimate=pl.CostEstimate(flops=flops,
                                      transcendentals=transcendentals,
                                      bytes_accessed=bytes_accessed),
    )(x_p, noise, w0, w_slab, b_slab)

    probs = probs_p[:B, :num_out]
    action = misc_p[:B, 0].astype(jnp.int32)
    log_prob = misc_p[:B, 1]
    return probs, action, log_prob


def init_params(key, input_vector_size, num_tasks, hidden_size, param_dtype=jnp.float32):
    """PyTorch-style init U(-1/sqrt(fan_in), 1/sqrt(fan_in)).

    Weights stored pre-transposed as (in, out) so the kernel does y = x @ W + b.
    Layer 1 weight is separate (real input width); layers 2..4 are zero-padded
    to a common lane-aligned width D=round_up(max(hidden, num_out), 128) and
    packed into one slab.  Use param_dtype=jnp.bfloat16 on v6e/v7x.
    """
    num_out = num_tasks + 1
    D = _round_up(max(hidden_size, num_out), _LANE)
    dims = [(input_vector_size, hidden_size),
            (hidden_size, hidden_size),
            (hidden_size, hidden_size),
            (hidden_size, num_out)]

    w0 = jnp.zeros((input_vector_size, D), param_dtype)
    w_slab = jnp.zeros((3, D, D), param_dtype)
    b_slab = jnp.zeros((4, 1, D), jnp.float32)
    b_slab = b_slab.at[3].set(_NEG)               # mask padded logit columns
    for l, (fan_in, fan_out) in enumerate(dims):
        key, kw, kb = jax.random.split(key, 3)
        bound = 1.0 / (fan_in ** 0.5)
        w = jax.random.uniform(kw, (fan_in, fan_out), jnp.float32, -bound, bound)
        b = jax.random.uniform(kb, (fan_out,), jnp.float32, -bound, bound)
        if l == 0:
            w0 = w0.at[:, :fan_out].set(w.astype(param_dtype))
        else:
            w_slab = w_slab.at[l - 1, :fan_in, :fan_out].set(w.astype(param_dtype))
        b_slab = b_slab.at[l, 0, :fan_out].set(b)
    return w0, w_slab, b_slab, D, num_out


if __name__ == "__main__":
    # Shapes consistent with the module: input vector = 2*num_tasks, hidden=32.
    num_tasks = 8
    input_vector_size = 2 * num_tasks      # 16
    hidden_size = 32
    batch = 4                              # torch forward handles one worker; small batch here

    key = jax.random.PRNGKey(0)
    k_param, k_x, k_noise = jax.random.split(key, 3)
    w0, w_slab, b_slab, D, num_out = init_params(k_param, input_vector_size,
                                                 num_tasks, hidden_size)
    x = jax.random.normal(k_x, (batch, input_vector_size), jnp.float32)

    probs, action, log_prob = linear_ffnet_forward(x, k_noise, w0, w_slab, b_slab,
                                                   num_out=num_out)
    probs, action, log_prob = jax.block_until_ready((probs, action, log_prob))

    # Pure-JAX reference for the deterministic part (probs).
    hp = jnp.maximum(x @ w0 + b_slab[0], 0.0)
    for l in range(2):
        hp = jnp.maximum(hp @ w_slab[l] + b_slab[l + 1], 0.0)
    ref_logits = hp @ w_slab[2] + b_slab[3]
    ref_probs = jax.nn.softmax(ref_logits[:, :num_out], axis=-1)

    # TODO(synk): the torch module exits the process on NaN probs and samples with
    # numpy's RNG; here the NaN guard is a host-side assert and sampling is an
    # in-kernel exponential race driven by JAX-generated Exp(1) noise (same
    # categorical distribution, different random stream).
    assert probs.shape == (batch, num_out)
    assert action.shape == (batch,) and log_prob.shape == (batch,)
    assert bool(jnp.isfinite(probs).all())
    assert bool(jnp.all(jnp.abs(jnp.sum(probs, axis=-1) - 1.0) < 1e-4))
    assert bool(jnp.allclose(probs, ref_probs, atol=2e-3))
    for i in range(batch):
        a = int(action[i])
        assert 0 <= a < num_out
        assert abs(float(log_prob[i]) - float(jnp.log(probs[i, a]))) < 1e-2

    print("KERNEL_OK")
</pallas_src>

<mosaic_0001>
module attributes {stable_mosaic.version = 11 : i64} {
  func.func @_ffnet_kernel(%arg0: i32, %arg1: memref<8x16xf32, #tpu.memory_space<vmem>>, %arg2: memref<8x128xf32, #tpu.memory_space<vmem>>, %arg3: memref<16x128xf32, #tpu.memory_space<vmem>>, %arg4: memref<3x128x128xf32, #tpu.memory_space<vmem>>, %arg5: memref<4x1x128xf32, #tpu.memory_space<vmem>>, %arg6: memref<8x128xf32, #tpu.memory_space<vmem>>, %arg7: memref<8x128xf32, #tpu.memory_space<vmem>>) attributes {dimension_semantics = [#tpu.dimension_semantics<parallel>], iteration_bounds = array<i64: 1>, scalar_prefetch = 0 : i64, scratch_operands = 0 : i64, tpu.core_type = #tpu.core_type<tc>, window_params = [{transform_indices = @transform_0, window_bounds = array<i64: 8, 16>}, {transform_indices = @transform_1, window_bounds = array<i64: 8, 128>}, {pipeline_mode = #tpu.pipeline_mode<synchronous>, transform_indices = @transform_2, window_bounds = array<i64: 16, 128>}, {pipeline_mode = #tpu.pipeline_mode<synchronous>, transform_indices = @transform_3, window_bounds = array<i64: 3, 128, 128>}, {pipeline_mode = #tpu.pipeline_mode<synchronous>, transform_indices = @transform_4, window_bounds = array<i64: 4, 1, 128>}, {transform_indices = @transform_5, window_bounds = array<i64: 8, 128>}, {transform_indices = @transform_6, window_bounds = array<i64: 8, 128>}]} {
    %c0 = arith.constant 0 : index
    %c0_0 = arith.constant 0 : index
    %0 = vector.load %arg1[%c0, %c0_0] : memref<8x16xf32, #tpu.memory_space<vmem>>, vector<8x16xf32>
    %c0_1 = arith.constant 0 : index
    %c0_2 = arith.constant 0 : index
    %1 = vector.load %arg3[%c0_1, %c0_2] : memref<16x128xf32, #tpu.memory_space<vmem>>, vector<16x128xf32>
    %cst = arith.constant dense<0.000000e+00> : vector<8x128xf32>
    %2 = tpu.matmul %0, %1, %cst {dimension_numbers = #tpu.dot_dimension_numbers<[1], [0], [0], [1], [0, 0, 1, 1], [], []>} : vector<8x16xf32>, vector<16x128xf32>, vector<8x128xf32> -> vector<8x128xf32>
    %c0_3 = arith.constant 0 : index
    %c0_4 = arith.constant 0 : index
    %c0_5 = arith.constant 0 : index
    %3 = vector.load %arg5[%c0_3, %c0_4, %c0_5] : memref<4x1x128xf32, #tpu.memory_space<vmem>>, vector<1x1x128xf32>
    %4 = vector.shape_cast %3 : vector<1x1x128xf32> to vector<1x128xf32>
    %5 = vector.broadcast %4 : vector<1x128xf32> to vector<8x128xf32>
    %6 = arith.addf %2, %5 : vector<8x128xf32>
    %cst_6 = arith.constant 0.000000e+00 : f32
    %7 = vector.broadcast %cst_6 : f32 to vector<8x128xf32>
    %8 = arith.maximumf %6, %7 : vector<8x128xf32>
    %c0_7 = arith.constant 0 : index
    %c0_8 = arith.constant 0 : index
    %c0_9 = arith.constant 0 : index
    %9 = vector.load %arg4[%c0_7, %c0_8, %c0_9] : memref<3x128x128xf32, #tpu.memory_space<vmem>>, vector<1x128x128xf32>
    %10 = vector.shape_cast %9 : vector<1x128x128xf32> to vector<128x128xf32>
    %cst_10 = arith.constant dense<0.000000e+00> : vector<8x128xf32>
    %11 = tpu.matmul %8, %10, %cst_10 {dimension_numbers = #tpu.dot_dimension_numbers<[1], [0], [0], [1], [0, 0, 1, 1], [], []>} : vector<8x128xf32>, vector<128x128xf32>, vector<8x128xf32> -> vector<8x128xf32>
    %c1 = arith.constant 1 : index
    %c0_11 = arith.constant 0 : index
    %c0_12 = arith.constant 0 : index
    %12 = vector.load %arg5[%c1, %c0_11, %c0_12] : memref<4x1x128xf32, #tpu.memory_space<vmem>>, vector<1x1x128xf32>
    %13 = vector.shape_cast %12 : vector<1x1x128xf32> to vector<1x128xf32>
    %14 = vector.broadcast %13 : vector<1x128xf32> to vector<8x128xf32>
    %15 = arith.addf %11, %14 : vector<8x128xf32>
    %cst_13 = arith.constant 0.000000e+00 : f32
    %16 = vector.broadcast %cst_13 : f32 to vector<8x128xf32>
    %17 = arith.maximumf %15, %16 : vector<8x128xf32>
    %c1_14 = arith.constant 1 : index
    %c0_15 = arith.constant 0 : index
    %c0_16 = arith.constant 0 : index
    %18 = vector.load %arg4[%c1_14, %c0_15, %c0_16] : memref<3x128x128xf32, #tpu.memory_space<vmem>>, vector<1x128x128xf32>
    %19 = vector.shape_cast %18 : vector<1x128x128xf32> to vector<128x128xf32>
    %cst_17 = arith.constant dense<0.000000e+00> : vector<8x128xf32>
    %20 = tpu.matmul %17, %19, %cst_17 {dimension_numbers = #tpu.dot_dimension_numbers<[1], [0], [0], [1], [0, 0, 1, 1], [], []>} : vector<8x128xf32>, vector<128x128xf32>, vector<8x128xf32> -> vector<8x128xf32>
    %c2 = arith.constant 2 : index
    %c0_18 = arith.constant 0 : index
    %c0_19 = arith.constant 0 : index
    %21 = vector.load %arg5[%c2, %c0_18, %c0_19] : memref<4x1x128xf32, #tpu.memory_space<vmem>>, vector<1x1x128xf32>
    %22 = vector.shape_cast %21 : vector<1x1x128xf32> to vector<1x128xf32>
    %23 = vector.broadcast %22 : vector<1x128xf32> to vector<8x128xf32>
    %24 = arith.addf %20, %23 : vector<8x128xf32>
    %cst_20 = arith.constant 0.000000e+00 : f32
    %25 = vector.broadcast %cst_20 : f32 to vector<8x128xf32>
    %26 = arith.maximumf %24, %25 : vector<8x128xf32>
    %c2_21 = arith.constant 2 : index
    %c0_22 = arith.constant 0 : index
    %c0_23 = arith.constant 0 : index
    %27 = vector.load %arg4[%c2_21, %c0_22, %c0_23] : memref<3x128x128xf32, #tpu.memory_space<vmem>>, vector<1x128x128xf32>
    %28 = vector.shape_cast %27 : vector<1x128x128xf32> to vector<128x128xf32>
    %cst_24 = arith.constant dense<0.000000e+00> : vector<8x128xf32>
    %29 = tpu.matmul %26, %28, %cst_24 {dimension_numbers = #tpu.dot_dimension_numbers<[1], [0], [0], [1], [0, 0, 1, 1], [], []>} : vector<8x128xf32>, vector<128x128xf32>, vector<8x128xf32> -> vector<8x128xf32>
    %c3 = arith.constant 3 : index
    %c0_25 = arith.constant 0 : index
    %c0_26 = arith.constant 0 : index
    %30 = vector.load %arg5[%c3, %c0_25, %c0_26] : memref<4x1x128xf32, #tpu.memory_space<vmem>>, vector<1x1x128xf32>
    %31 = vector.shape_cast %30 : vector<1x1x128xf32> to vector<1x128xf32>
    %32 = vector.broadcast %31 : vector<1x128xf32> to vector<8x128xf32>
    %33 = arith.addf %29, %32 : vector<8x128xf32>
    %cst_27 = arith.constant dense<0xFF800000> : vector<8xf32>
    %34 = vector.multi_reduction <maximumf>, %33, %cst_27 [1] : vector<8x128xf32> to vector<8xf32>
    %35 = vector.shape_cast %34 : vector<8xf32> to vector<8x1xf32>
    %36 = vector.broadcast %35 : vector<8x1xf32> to vector<8x128xf32>
    %37 = arith.subf %33, %36 : vector<8x128xf32>
    %38 = math.exp %37 : vector<8x128xf32>
    %cst_28 = arith.constant dense<0.000000e+00> : vector<8xf32>
    %39 = vector.multi_reduction <add>, %38, %cst_28 [1] : vector<8x128xf32> to vector<8xf32>
    %40 = vector.shape_cast %39 : vector<8xf32> to vector<8x1xf32>
    %41 = vector.broadcast %40 : vector<8x1xf32> to vector<8x128xf32>
    %42 = arith.divf %38, %41 : vector<8x128xf32>
    %c0_29 = arith.constant 0 : index
    %c0_30 = arith.constant 0 : index
    %43 = vector.load %arg6[%c0_29, %c0_30] : memref<8x128xf32, #tpu.memory_space<vmem>>, vector<8x128xf32>
    tpu.vector_store %arg6[%c0_29, %c0_30], %42 {strides = array<i32>} : memref<8x128xf32, #tpu.memory_space<vmem>>, vector<8x128xf32>,
    %44 = math.log %40 : vector<8x1xf32>
    %45 = vector.broadcast %44 : vector<8x1xf32> to vector<8x128xf32>
    %46 = arith.subf %37, %45 : vector<8x128xf32>
    %c0_31 = arith.constant 0 : index
    %c0_32 = arith.constant 0 : index
    %47 = vector.load %arg2[%c0_31, %c0_32] : memref<8x128xf32, #tpu.memory_space<vmem>>, vector<8x128xf32>
    %cst_33 = arith.constant 0.000000e+00 : f32
    %48 = vector.broadcast %cst_33 : f32 to vector<8x128xf32>
    %49 = arith.cmpf ogt, %38, %48 : vector<8x128xf32>
    %50 = arith.divf %47, %38 : vector<8x128xf32>
    %cst_34 = arith.constant 0x7F800000 : f32
    %51 = vector.broadcast %cst_34 : f32 to vector<8x128xf32>
    %52 = arith.select %49, %50, %51 : vector<8x128xi1>, vector<8x128xf32>
    %53 = tpu.iota {dimensions = array<i32: 1>} : vector<8x128xi32>
    %cst_35 = arith.constant dense<0x7F800000> : vector<8xf32>
    %54 = vector.multi_reduction <minimumf>, %52, %cst_35 [1] : vector<8x128xf32> to vector<8xf32>
    %55 = vector.shape_cast %54 : vector<8xf32> to vector<8x1xf32>
    %56 = vector.broadcast %55 : vector<8x1xf32> to vector<8x128xf32>
    %57 = arith.cmpf oeq, %52, %56 : vector<8x128xf32>
    %c128_i32 = arith.constant 128 : i32
    %58 = vector.broadcast %c128_i32 : i32 to vector<8x128xi32>
    %59 = arith.select %57, %53, %58 : vector<8x128xi1>, vector<8x128xi32>
    %cst_36 = arith.constant dense<2147483647> : vector<8xi32>
    %60 = vector.multi_reduction <minsi>, %59, %cst_36 [1] : vector<8x128xi32> to vector<8xi32>
    %61 = vector.shape_cast %60 : vector<8xi32> to vector<8x1xi32>
    %62 = vector.broadcast %61 : vector<8x1xi32> to vector<8x128xi32>
    %63 = arith.cmpi eq, %53, %62 : vector<8x128xi32>
    %cst_37 = arith.constant 0.000000e+00 : f32
    %64 = vector.broadcast %cst_37 : f32 to vector<8x128xf32>
    %65 = arith.select %63, %46, %64 : vector<8x128xi1>, vector<8x128xf32>
    %cst_38 = arith.constant dense<0.000000e+00> : vector<8xf32>
    %66 = vector.multi_reduction <add>, %65, %cst_38 [1] : vector<8x128xf32> to vector<8xf32>
    %67 = vector.shape_cast %66 : vector<8xf32> to vector<8x1xf32>
    %68 = tpu.iota {dimensions = array<i32: 1>} : vector<8x128xi32>
    %c0_i32 = arith.constant 0 : i32
    %69 = vector.broadcast %c0_i32 : i32 to vector<8x128xi32>
    %70 = arith.cmpi eq, %68, %69 : vector<8x128xi32>
    %71 = arith.sitofp %61 : vector<8x1xi32> to vector<8x1xf32>
    %c1_i32 = arith.constant 1 : i32
    %72 = vector.broadcast %c1_i32 : i32 to vector<8x128xi32>
    %73 = arith.cmpi eq, %68, %72 : vector<8x128xi32>
    %cst_39 = arith.constant 0.000000e+00 : f32
    %74 = vector.shape_cast %67 : vector<8x1xf32> to vector<8x1xf32>
    %75 = vector.broadcast %74 : vector<8x1xf32> to vector<8x128xf32>
    %76 = vector.broadcast %cst_39 : f32 to vector<8x128xf32>
    %77 = arith.select %73, %75, %76 : vector<8x128xi1>, vector<8x128xf32>
    %78 = vector.shape_cast %71 : vector<8x1xf32> to vector<8x1xf32>
    %79 = vector.broadcast %78 : vector<8x1xf32> to vector<8x128xf32>
    %80 = arith.select %70, %79, %77 : vector<8x128xi1>, vector<8x128xf32>
    %c0_40 = arith.constant 0 : index
    %c0_41 = arith.constant 0 : index
    %81 = vector.load %arg7[%c0_40, %c0_41] : memref<8x128xf32, #tpu.memory_space<vmem>>, vector<8x128xf32>
    tpu.vector_store %arg7[%c0_40, %c0_41], %80 {strides = array<i32>} : memref<8x128xf32, #tpu.memory_space<vmem>>, vector<8x128xf32>,
    return
  }
  func.func @transform_0(%arg0: i32) -> (i32, i32) {
    %c0_i32 = arith.constant 0 : i32
    %c0_i32_0 = arith.constant 0 : i32
    return %arg0, %c0_i32 : i32, i32
  }
  func.func @transform_1(%arg0: i32) -> (i32, i32) {
    %c0_i32 = arith.constant 0 : i32
    %c0_i32_0 = arith.constant 0 : i32
    return %arg0, %c0_i32 : i32, i32
  }
  func.func @transform_2(%arg0: i32) -> (i32, i32) {
    %c0_i32 = arith.constant 0 : i32
    %c0_i32_0 = arith.constant 0 : i32
    %c0_i32_1 = arith.constant 0 : i32
    return %c0_i32, %c0_i32_0 : i32, i32
  }
  func.func @transform_3(%arg0: i32) -> (i32, i32, i32) {
    %c0_i32 = arith.constant 0 : i32
    %c0_i32_0 = arith.constant 0 : i32
    %c0_i32_1 = arith.constant 0 : i32
    %c0_i32_2 = arith.constant 0 : i32
    return %c0_i32, %c0_i32_0, %c0_i32_1 : i32, i32, i32
  }
  func.func @transform_4(%arg0: i32) -> (i32, i32, i32) {
    %c0_i32 = arith.constant 0 : i32
    %c0_i32_0 = arith.constant 0 : i32
    %c0_i32_1 = arith.constant 0 : i32
    %c0_i32_2 = arith.constant 0 : i32
    return %c0_i32, %c0_i32_0, %c0_i32_1 : i32, i32, i32
  }
  func.func @transform_5(%arg0: i32) -> (i32, i32) {
    %c0_i32 = arith.constant 0 : i32
    %c0_i32_0 = arith.constant 0 : i32
    return %arg0, %c0_i32 : i32, i32
  }
  func.func @transform_6(%arg0: i32) -> (i32, i32) {
    %c0_i32 = arith.constant 0 : i32
    %c0_i32_0 = arith.constant 0 : i32
    return %arg0, %c0_i32 : i32, i32
  }
}

</mosaic_0001>

<llo_original>
// kernel: linear_ffnet_forward.1
$region0: #{linear_ffnet_forward.1}
  #allocation0 [shape = 'u32[]', space=smem, size = 0x4, offset = 0x4, fixed_abs, tag = 'smem constant byte address 0x4 - core index']
  #allocation1 [shape = 'u32[144,128]{1,0:T(1,128)}', space=vmem, size = 0x12000, scoped, tag = 'internal scratch']
  %s0 = inlined_call_operand.vmem [shape: f32[8,16], index: 0, kind: input, shape index: {}]
  %s1 = inlined_call_operand.vmem [shape: f32[8,128], index: 1, kind: input, shape index: {}]
  %s2 = inlined_call_operand.vmem [shape: f32[16,128], index: 2, kind: input, shape index: {}]
  %s3 = inlined_call_operand.hbm [shape: f32[3,128,128], index: 3, kind: input, shape index: {}]
  %s4 = inlined_call_operand.vmem [shape: f32[4,1,128], index: 4, kind: input, shape index: {}]
  %s5 = inlined_call_operand.vmem [shape: f32[8,128], index: 5, kind: output, shape index: {0}]
  %s6 = inlined_call_operand.vmem [shape: f32[8,128], index: 6, kind: output, shape index: {1}]
  %7 = xla_tuple %s5, %s6
  %s8 = sld [smem:[#allocation0]]
  $region42: #{linear_ffnet_forward.1} parent=0
    _
  %s10 = ssub.s32 1, %s8
  %s11 = scalar_select 0, %s10, %s8
  $region1: #{linear_ffnet_forward.1} parent=0
    #allocation2 [shape = 'u8[196608]{0}', space=vmem, size = 0x30000, scoped, tag = 'input window, operand 3, single buffered']
    #allocation3 [shape = 's32[1]{0}', space=sflag, size = 0x4, scoped, tag = 'scoped memory for linear_ffnet_forward.1']
    %12 = vsyncpa [#allocation3], 0
    // Predicated region
    $region2: #{linear_ffnet_forward.1} parent=1 // pred_check
      _
    $region3: #{linear_ffnet_forward.1} parent=1 // pred_check_branch
      %14 = sbr.rel (0) target = $region5
    $region4: #{linear_ffnet_forward.1} parent=1 // pred_region
      _
    $region5: #{linear_ffnet_forward.1} parent=1 // pred_fallthru
      _
    // Predicated region
    $region6: #{linear_ffnet_forward.1} parent=1 // pred_check
      _
    $region7: #{linear_ffnet_forward.1} parent=1 // pred_check_branch
      %16 = sbr.rel (0) target = $region9
    $region8: #{linear_ffnet_forward.1} parent=1 // pred_region
      _
    $region9: #{linear_ffnet_forward.1} parent=1 // pred_fallthru
      _
    // Predicated region
    $region10: #{linear_ffnet_forward.1} parent=1 // pred_check
      _
    $region11: #{linear_ffnet_forward.1} parent=1 // pred_check_branch
      %18 = sbr.rel (0) target = $region13
    $region12: #{linear_ffnet_forward.1} parent=1 // pred_region
      _
    $region13: #{linear_ffnet_forward.1} parent=1 // pred_fallthru
      _
    // Predicated region
    $region14: #{linear_ffnet_forward.1} parent=1 // pred_check
      _
    $region15: #{linear_ffnet_forward.1} parent=1 // pred_check_branch
      %20 = sbr.rel (0) target = $region17
    $region16: #{linear_ffnet_forward.1} parent=1 // pred_region
      %s22 = ssub.s32 6144, 6144
      %23 = vsyncadd [#allocation3], %s22
      %s24 = sshll.u32 [#allocation2], 4
      %s25 = int_to_ptr.vmem [resolvable:$true] %s24
      %30 = dma.hbm_to_vmem [thread:$0]  %s3, 6144, %s25, [#allocation3], 128, 128, 8
    $region17: #{linear_ffnet_forward.1} parent=1 // pred_fallthru
      _
    // Predicated region
    $region18: #{linear_ffnet_forward.1} parent=1 // pred_check
      _
    $region19: #{linear_ffnet_forward.1} parent=1 // pred_check_branch
      %32 = sbr.rel (0) target = $region21
    $region20: #{linear_ffnet_forward.1} parent=1 // pred_region
      _
    $region21: #{linear_ffnet_forward.1} parent=1 // pred_fallthru
      _
    // Predicated region
    $region22: #{linear_ffnet_forward.1} parent=1 // pred_check
      _
    $region23: #{linear_ffnet_forward.1} parent=1 // pred_check_branch
      %34 = sbr.rel (0) target = $region25
    $region24: #{linear_ffnet_forward.1} parent=1 // pred_region
      %35 = dma.done [#allocation3], 6144
    $region25: #{linear_ffnet_forward.1} parent=1 // pred_fallthru
      _
    %v36 = vld [vmem:[%s0] sm:$0xff]
    %v37 = vld [vmem:[%s2] sm:$0xff]
    %v38 = vld [vmem:[%s2 + $0x8] sm:$0xff]
    %v39 = vld [vmem:[%s4] sm:$0x1]
    %v41 = vlaneseq
    %v42 = vshrl.u32 %v41, 7
    %v43 = vsub.s32 0, %v42
    %v44 = vrot.slane %v39, %v43
    %vm46 = vcmask 130048
    %v48 = vsel %vm46, %v36, 0
    %50 = vmatprep.subr.mxu0 0.0
    %51 = vmatpush1.msra.mxu0 %v37
    %52 = vmatprep.subr.mxu0 0.0
    %53 = vmatpush1.msra.mxu0 %v38
    %54 = vmatprep.subr.mxu0 0.0
    %55 = vmatpush1.msra.mxu0 0.0
    %56 = vmatprep.subr.mxu0 0.0
    %57 = vmatpush1.msra.mxu0 0.0
    %58 = vmatprep.subr.mxu0 0.0
    %59 = vmatpush1.msra.mxu0 0.0
    %60 = vmatprep.subr.mxu0 0.0
    %61 = vmatpush1.msra.mxu0 0.0
    %62 = vmatprep.subr.mxu0 0.0
    %63 = vmatpush1.msra.mxu0 0.0
    %64 = vmatprep.subr.mxu0 0.0
    %65 = vmatpush1.msra.mxu0 0.0
    %66 = vmatprep.subr.mxu0 0.0
    %67 = vmatpush1.msra.mxu0 0.0
    %68 = vmatprep.subr.mxu0 0.0
    %69 = vmatpush1.msra.mxu0 0.0
    %70 = vmatprep.subr.mxu0 0.0
    %71 = vmatpush1.msra.mxu0 0.0
    %72 = vmatprep.subr.mxu0 0.0
    %73 = vmatpush1.msra.mxu0 0.0
    %74 = vmatprep.subr.mxu0 0.0
    %75 = vmatpush1.msra.mxu0 0.0
    %76 = vmatprep.subr.mxu0 0.0
    %77 = vmatpush1.msra.mxu0 0.0
    %78 = vmatprep.subr.mxu0 0.0
    %79 = vmatpush1.msra.mxu0 0.0
    %80 = vmatprep.subr.mxu0 0.0
    %81 = vmatpush1.msra.mxu0 0.0
    %82 = vmatprep.subr.mxu0 0.0
    %83 = vmatpush1.msra.mxu0 0.0
    %84 = vmatprep.subr.mxu0 0.0
    %85 = vmatpush1.msra.mxu0 0.0
    %86 = vmatprep.subr.mxu0 0.0
    %87 = vmatpush1.msra.mxu0 0.0
    %88 = vmatprep.subr.mxu0 0.0
    %89 = vmatpush1.msra.mxu0 0.0
    %90 = vmatprep.subr.mxu0 0.0
    %91 = vmatpush1.msra.mxu0 0.0
    %92 = vmatprep.subr.mxu0 0.0
    %93 = vmatpush1.msra.mxu0 0.0
    %94 = vmatprep.subr.mxu0 0.0
    %95 = vmatpush1.msra.mxu0 0.0
    %96 = vmatprep.subr.mxu0 0.0
    %97 = vmatpush1.msra.mxu0 0.0
    %98 = vmatprep.subr.mxu0 0.0
    %99 = vmatpush1.msra.mxu0 0.0
    %100 = vmatprep.subr.mxu0 0.0
    %101 = vmatpush1.msra.mxu0 0.0
    %102 = vmatprep.subr.mxu0 0.0
    %103 = vmatpush1.msra.mxu0 0.0
    %104 = vmatprep.subr.mxu0 0.0
    %105 = vmatpush1.msra.mxu0 0.0
    %106 = vmatprep.subr.mxu0 0.0
    %107 = vmatpush1.msra.mxu0 0.0
    %108 = vmatprep.subr.mxu0 0.0
    %109 = vmatpush1.msra.mxu0 0.0
    %110 = vmatprep.subr.mxu0 0.0
    %111 = vmatpush1.msra.mxu0 0.0
    %112 = vmatprep.subr.mxu0 0.0
    %113 = vmatpush1.msra.mxu0 0.0
    %114 = vmatprep.mubr.f32.mxu0 0.0
    %115 = vmatmul.mubr.f32.gmra.mrb[0].mxu0 %v48
    %v116 = vpop.f32.mrb[0].mxu0
    %v117 = vadd.f32 %v44, %v116
    %v118 = vpop.f32.mrb[0].mxu0
    %119 = vdwg.mxu0
    %v120 = vmax.f32 %v117, 0.0
    %v121 = vld [vmem:[#allocation2] sm:$0xff]
    %v122 = vld [vmem:[#allocation2 + $0x8] sm:$0xff]
    %v123 = vld [vmem:[#allocation2 + $0x10] sm:$0xff]
    %v124 = vld [vmem:[#allocation2 + $0x18] sm:$0xff]
    %v125 = vld [vmem:[#allocation2 + $0x20] sm:$0xff]
    %v126 = vld [vmem:[#allocation2 + $0x28] sm:$0xff]
    %v127 = vld [vmem:[#allocation2 + $0x30] sm:$0xff]
    %v128 = vld [vmem:[#allocation2 + $0x38] sm:$0xff]
    %v129 = vld [vmem:[#allocation2 + $0x40] sm:$0xff]
    %v130 = vld [vmem:[#allocation2 + $0x48] sm:$0xff]
    %v131 = vld [vmem:[#allocation2 + $0x50] sm:$0xff]
    %v132 = vld [vmem:[#allocation2 + $0x58] sm:$0xff]
    %v133 = vld [vmem:[#allocation2 + $0x60] sm:$0xff]
    %v134 = vld [vmem:[#allocation2 + $0x68] sm:$0xff]
    %v135 = vld [vmem:[#allocation2 + $0x70] sm:$0xff]
    %v136 = vld [vmem:[#allocation2 + $0x78] sm:$0xff]
    %s137 = scalar_lea.vmem %s4, 1
    %v138 = vld [vmem:[%s137] sm:$0x1]
    %v140 = vlaneseq
    %v141 = vshrl.u32 %v140, 7
    %v142 = vsub.s32 0, %v141
    %v143 = vrot.slane %v138, %v142
    %145 = vmatprep.subr.mxu0 0.0
    %146 = vmatpush1.msra.mxu0 %v121
    %147 = vmatprep.subr.mxu0 0.0
    %148 = vmatpush1.msra.mxu0 %v122
    %149 = vmatprep.subr.mxu0 0.0
    %150 = vmatpush1.msra.mxu0 %v123
    %151 = vmatprep.subr.mxu0 0.0
    %152 = vmatpush1.msra.mxu0 %v124
    %153 = vmatprep.subr.mxu0 0.0
    %154 = vmatpush1.msra.mxu0 %v125
    %155 = vmatprep.subr.mxu0 0.0
    %156 = vmatpush1.msra.mxu0 %v126
    %157 = vmatprep.subr.mxu0 0.0
    %158 = vmatpush1.msra.mxu0 %v127
    %159 = vmatprep.subr.mxu0 0.0
    %160 = vmatpush1.msra.mxu0 %v128
    %161 = vmatprep.subr.mxu0 0.0
    %162 = vmatpush1.msra.mxu0 %v129
    %163 = vmatprep.subr.mxu0 0.0
    %164 = vmatpush1.msra.mxu0 %v130
    %165 = vmatprep.subr.mxu0 0.0
    %166 = vmatpush1.msra.mxu0 %v131
    %167 = vmatprep.subr.mxu0 0.0
    %168 = vmatpush1.msra.mxu0 %v132
    %169 = vmatprep.subr.mxu0 0.0
    %170 = vmatpush1.msra.mxu0 %v133
    %171 = vmatprep.subr.mxu0 0.0
    %172 = vmatpush1.msra.mxu0 %v134
    %173 = vmatprep.subr.mxu0 0.0
    %174 = vmatpush1.msra.mxu0 %v135
    %175 = vmatprep.subr.mxu0 0.0
    %176 = vmatpush1.msra.mxu0 %v136
    %177 = vmatprep.subr.mxu0 0.0
    %178 = vmatpush1.msra.mxu0 0.0
    %179 = vmatprep.subr.mxu0 0.0
    %180 = vmatpush1.msra.mxu0 0.0
    %181 = vmatprep.subr.mxu0 0.0
    %182 = vmatpush1.msra.mxu0 0.0
    %183 = vmatprep.subr.mxu0 0.0
    %184 = vmatpush1.msra.mxu0 0.0
    %185 = vmatprep.subr.mxu0 0.0
    %186 = vmatpush1.msra.mxu0 0.0
    %187 = vmatprep.subr.mxu0 0.0
    %188 = vmatpush1.msra.mxu0 0.0
    %189 = vmatprep.subr.mxu0 0.0
    %190 = vmatpush1.msra.mxu0 0.0
    %191 = vmatprep.subr.mxu0 0.0
    %192 = vmatpush1.msra.mxu0 0.0
    %193 = vmatprep.subr.mxu0 0.0
    %194 = vmatpush1.msra.mxu0 0.0
    %195 = vmatprep.subr.mxu0 0.0
    %196 = vmatpush1.msra.mxu0 0.0
    %197 = vmatprep.subr.mxu0 0.0
    %198 = vmatpush1.msra.mxu0 0.0
    %199 = vmatprep.subr.mxu0 0.0
    %200 = vmatpush1.msra.mxu0 0.0
    %201 = vmatprep.subr.mxu0 0.0
    %202 = vmatpush1.msra.mxu0 0.0
    %203 = vmatprep.subr.mxu0 0.0
    %204 = vmatpush1.msra.mxu0 0.0
    %205 = vmatprep.subr.mxu0 0.0
    %206 = vmatpush1.msra.mxu0 0.0
    %207 = vmatprep.subr.mxu0 0.0
    %208 = vmatpush1.msra.mxu0 0.0
    %209 = vmatprep.mubr.f32.mxu0 0.0
    %210 = vmatmul.mubr.f32.gmra.mrb[0].mxu0 %v120
    %v211 = vpop.f32.mrb[0].mxu0
    %v212 = vadd.f32 %v143, %v211
    %v213 = vpop.f32.mrb[0].mxu0
    %214 = vdwg.mxu0
    %v215 = vmax.f32 %v212, 0.0
    %s216 = scalar_lea.vmem [#allocation2], 128
    %v217 = vld [vmem:[%s216] sm:$0xff]
    %v218 = vld [vmem:[%s216 + $0x8] sm:$0xff]
    %v219 = vld [vmem:[%s216 + $0x10] sm:$0xff]
    %v220 = vld [vmem:[%s216 + $0x18] sm:$0xff]
    %v221 = vld [vmem:[%s216 + $0x20] sm:$0xff]
    %v222 = vld [vmem:[%s216 + $0x28] sm:$0xff]
    %v223 = vld [vmem:[%s216 + $0x30] sm:$0xff]
    %v224 = vld [vmem:[%s216 + $0x38] sm:$0xff]
    %v225 = vld [vmem:[%s216 + $0x40] sm:$0xff]
    %v226 = vld [vmem:[%s216 + $0x48] sm:$0xff]
    %v227 = vld [vmem:[%s216 + $0x50] sm:$0xff]
    %v228 = vld [vmem:[%s216 + $0x58] sm:$0xff]
    %v229 = vld [vmem:[%s216 + $0x60] sm:$0xff]
    %v230 = vld [vmem:[%s216 + $0x68] sm:$0xff]
    %v231 = vld [vmem:[%s216 + $0x70] sm:$0xff]
    %v232 = vld [vmem:[%s216 + $0x78] sm:$0xff]
    %s233 = scalar_lea.vmem %s4, 2
    %v234 = vld [vmem:[%s233] sm:$0x1]
    %v236 = vlaneseq
    %v237 = vshrl.u32 %v236, 7
    %v238 = vsub.s32 0, %v237
    %v239 = vrot.slane %v234, %v238
    %241 = vmatprep.subr.mxu0 0.0
    %242 = vmatpush1.msra.mxu0 %v217
    %243 = vmatprep.subr.mxu0 0.0
    %244 = vmatpush1.msra.mxu0 %v218
    %245 = vmatprep.subr.mxu0 0.0
    %246 = vmatpush1.msra.mxu0 %v219
    %247 = vmatprep.subr.mxu0 0.0
    %248 = vmatpush1.msra.mxu0 %v220
    %249 = vmatprep.subr.mxu0 0.0
    %250 = vmatpush1.msra.mxu0 %v221
    %251 = vmatprep.subr.mxu0 0.0
    %252 = vmatpush1.msra.mxu0 %v222
    %253 = vmatprep.subr.mxu0 0.0
    %254 = vmatpush1.msra.mxu0 %v223
    %255 = vmatprep.subr.mxu0 0.0
    %256 = vmatpush1.msra.mxu0 %v224
    %257 = vmatprep.subr.mxu0 0.0
    %258 = vmatpush1.msra.mxu0 %v225
    %259 = vmatprep.subr.mxu0 0.0
    %260 = vmatpush1.msra.mxu0 %v226
    %261 = vmatprep.subr.mxu0 0.0
    %262 = vmatpush1.msra.mxu0 %v227
    %263 = vmatprep.subr.mxu0 0.0
    %264 = vmatpush1.msra.mxu0 %v228
    %265 = vmatprep.subr.mxu0 0.0
    %266 = vmatpush1.msra.mxu0 %v229
    %267 = vmatprep.subr.mxu0 0.0
    %268 = vmatpush1.msra.mxu0 %v230
    %269 = vmatprep.subr.mxu0 0.0
    %270 = vmatpush1.msra.mxu0 %v231
    %271 = vmatprep.subr.mxu0 0.0
    %272 = vmatpush1.msra.mxu0 %v232
    %273 = vmatprep.subr.mxu0 0.0
    %274 = vmatpush1.msra.mxu0 0.0
    %275 = vmatprep.subr.mxu0 0.0
    %276 = vmatpush1.msra.mxu0 0.0
    %277 = vmatprep.subr.mxu0 0.0
    %278 = vmatpush1.msra.mxu0 0.0
    %279 = vmatprep.subr.mxu0 0.0
    %280 = vmatpush1.msra.mxu0 0.0
    %281 = vmatprep.subr.mxu0 0.0
    %282 = vmatpush1.msra.mxu0 0.0
    %283 = vmatprep.subr.mxu0 0.0
    %284 = vmatpush1.msra.mxu0 0.0
    %285 = vmatprep.subr.mxu0 0.0
    %286 = vmatpush1.msra.mxu0 0.0
    %287 = vmatprep.subr.mxu0 0.0
    %288 = vmatpush1.msra.mxu0 0.0
    %289 = vmatprep.subr.mxu0 0.0
    %290 = vmatpush1.msra.mxu0 0.0
    %291 = vmatprep.subr.mxu0 0.0
    %292 = vmatpush1.msra.mxu0 0.0
    %293 = vmatprep.subr.mxu0 0.0
    %294 = vmatpush1.msra.mxu0 0.0
    %295 = vmatprep.subr.mxu0 0.0
    %296 = vmatpush1.msra.mxu0 0.0
    %297 = vmatprep.subr.mxu0 0.0
    %298 = vmatpush1.msra.mxu0 0.0
    %299 = vmatprep.subr.mxu0 0.0
    %300 = vmatpush1.msra.mxu0 0.0
    %301 = vmatprep.subr.mxu0 0.0
    %302 = vmatpush1.msra.mxu0 0.0
    %303 = vmatprep.subr.mxu0 0.0
    %304 = vmatpush1.msra.mxu0 0.0
    %305 = vmatprep.mubr.f32.mxu0 0.0
    %306 = vmatmul.mubr.f32.gmra.mrb[0].mxu0 %v215
    %v307 = vpop.f32.mrb[0].mxu0
    %v308 = vadd.f32 %v239, %v307
    %v309 = vpop.f32.mrb[0].mxu0
    %310 = vdwg.mxu0
    %v311 = vmax.f32 %v308, 0.0
    %s312 = scalar_lea.vmem [#allocation2], 256
    %v313 = vld [vmem:[%s312] sm:$0xff]
    %v314 = vld [vmem:[%s312 + $0x8] sm:$0xff]
    %v315 = vld [vmem:[%s312 + $0x10] sm:$0xff]
    %v316 = vld [vmem:[%s312 + $0x18] sm:$0xff]
    %v317 = vld [vmem:[%s312 + $0x20] sm:$0xff]
    %v318 = vld [vmem:[%s312 + $0x28] sm:$0xff]
    %v319 = vld [vmem:[%s312 + $0x30] sm:$0xff]
    %v320 = vld [vmem:[%s312 + $0x38] sm:$0xff]
    %v321 = vld [vmem:[%s312 + $0x40] sm:$0xff]
    %v322 = vld [vmem:[%s312 + $0x48] sm:$0xff]
    %v323 = vld [vmem:[%s312 + $0x50] sm:$0xff]
    %v324 = vld [vmem:[%s312 + $0x58] sm:$0xff]
    %v325 = vld [vmem:[%s312 + $0x60] sm:$0xff]
    %v326 = vld [vmem:[%s312 + $0x68] sm:$0xff]
    %v327 = vld [vmem:[%s312 + $0x70] sm:$0xff]
    %v328 = vld [vmem:[%s312 + $0x78] sm:$0xff]
    %s329 = scalar_lea.vmem %s4, 3
    %v330 = vld [vmem:[%s329] sm:$0x1]
    %v332 = vlaneseq
    %v333 = vshrl.u32 %v332, 7
    %v334 = vsub.s32 0, %v333
    %v335 = vrot.slane %v330, %v334
    %337 = vmatprep.subr.mxu0 0.0
    %338 = vmatpush1.msra.mxu0 %v313
    %339 = vmatprep.subr.mxu0 0.0
    %340 = vmatpush1.msra.mxu0 %v314
    %341 = vmatprep.subr.mxu0 0.0
    %342 = vmatpush1.msra.mxu0 %v315
    %343 = vmatprep.subr.mxu0 0.0
    %344 = vmatpush1.msra.mxu0 %v316
    %345 = vmatprep.subr.mxu0 0.0
    %346 = vmatpush1.msra.mxu0 %v317
    %347 = vmatprep.subr.mxu0 0.0
    %348 = vmatpush1.msra.mxu0 %v318
    %349 = vmatprep.subr.mxu0 0.0
    %350 = vmatpush1.msra.mxu0 %v319
    %351 = vmatprep.subr.mxu0 0.0
    %352 = vmatpush1.msra.mxu0 %v320
    %353 = vmatprep.subr.mxu0 0.0
    %354 = vmatpush1.msra.mxu0 %v321
    %355 = vmatprep.subr.mxu0 0.0
    %356 = vmatpush1.msra.mxu0 %v322
    %357 = vmatprep.subr.mxu0 0.0
    %358 = vmatpush1.msra.mxu0 %v323
    %359 = vmatprep.subr.mxu0 0.0
    %360 = vmatpush1.msra.mxu0 %v324
    %361 = vmatprep.subr.mxu0 0.0
    %362 = vmatpush1.msra.mxu0 %v325
    %363 = vmatprep.subr.mxu0 0.0
    %364 = vmatpush1.msra.mxu0 %v326
    %365 = vmatprep.subr.mxu0 0.0
    %366 = vmatpush1.msra.mxu0 %v327
    %367 = vmatprep.subr.mxu0 0.0
    %368 = vmatpush1.msra.mxu0 %v328
    %369 = vmatprep.subr.mxu0 0.0
    %370 = vmatpush1.msra.mxu0 0.0
    %371 = vmatprep.subr.mxu0 0.0
    %372 = vmatpush1.msra.mxu0 0.0
    %373 = vmatprep.subr.mxu0 0.0
    %374 = vmatpush1.msra.mxu0 0.0
    %375 = vmatprep.subr.mxu0 0.0
    %376 = vmatpush1.msra.mxu0 0.0
    %377 = vmatprep.subr.mxu0 0.0
    %378 = vmatpush1.msra.mxu0 0.0
    %379 = vmatprep.subr.mxu0 0.0
    %380 = vmatpush1.msra.mxu0 0.0
    %381 = vmatprep.subr.mxu0 0.0
    %382 = vmatpush1.msra.mxu0 0.0
    %383 = vmatprep.subr.mxu0 0.0
    %384 = vmatpush1.msra.mxu0 0.0
    %385 = vmatprep.subr.mxu0 0.0
    %386 = vmatpush1.msra.mxu0 0.0
    %387 = vmatprep.subr.mxu0 0.0
    %388 = vmatpush1.msra.mxu0 0.0
    %389 = vmatprep.subr.mxu0 0.0
    %390 = vmatpush1.msra.mxu0 0.0
    %391 = vmatprep.subr.mxu0 0.0
    %392 = vmatpush1.msra.mxu0 0.0
    %393 = vmatprep.subr.mxu0 0.0
    %394 = vmatpush1.msra.mxu0 0.0
    %395 = vmatprep.subr.mxu0 0.0
    %396 = vmatpush1.msra.mxu0 0.0
    %397 = vmatprep.subr.mxu0 0.0
    %398 = vmatpush1.msra.mxu0 0.0
    %399 = vmatprep.subr.mxu0 0.0
    %400 = vmatpush1.msra.mxu0 0.0
    %401 = vmatprep.mubr.f32.mxu0 0.0
    %402 = vmatmul.mubr.f32.gmra.mrb[0].mxu0 %v311
    %v403 = vpop.f32.mrb[0].mxu0
    %v404 = vadd.f32 %v335, %v403
    %v405 = vpop.f32.mrb[0].mxu0
    %406 = vdwg.mxu0
    %407 = vmax.xlane.f32.xlu0 %v404
    %v408 = vpop.xlane.xlu0 %407
    %v409 = vsub.f32 %v404, %v408
    %v410 = vmul.f32 %v409, 1.442695
    %v411 = vpow.pop %v410
    %412 = vadd.xlane.f32.xlu0 %v411
    %v413 = vpop.xlane.xlu0 %412
    %v414 = vrcp.pop %v413
    %v415 = vmul.f32 %v411, %v414
    %416 = vst [vmem:[%s5] sm:$0xff] %v415
    %v417 = vlog2.pop %v413
    %v418 = vmul.f32 %v417, 0.6931472
    %v419 = vsub.f32 %v409, %v418
    %v420 = vld [vmem:[%s1] sm:$0xff]
    %vm421 = vcmp.gt.f32.partialorder %v411, 0.0
    %v422 = vrcp.pop %v411
    %v423 = vmul.f32 %v420, %v422
    %v424 = vsel %vm421, %v423, inf
    %v425 = vlaneseq
    %v426 = vand.u32 %v425, 127
    %427 = vmin.xlane.f32.xlu0 %v424
    %v428 = vpop.xlane.xlu0 %427
    %vm429 = vcmp.eq.f32.partialorder %v424, %v428
    %v430 = vsel %vm429, %v426, 128
    %v431 = vand.u32 %v430, 65535
    %v432 = vshra.s32 %v430, 16
    %v433 = vcvt.s32.f32 %v431
    %v434 = vcvt.s32.f32 %v432
    %435 = vmin.xlane.f32.xlu0 %v434
    %v436 = vpop.xlane.xlu0 %435
    %vm437 = vcmp.eq.f32.partialorder %v434, %v436
    %v438 = vsel %vm437, %v433, inf
    %439 = vmin.xlane.f32.xlu0 %v438
    %v440 = vpop.xlane.xlu0 %439
    %v441 = vcvt.f32.s32 %v440
    %v442 = vcvt.f32.s32 %v436
    %v443 = vshll.u32 %v442, 16
    %v444 = vadd.s32 %v443, %v441
    %vm445 = vcmp.eq.s32.totalorder %v426, %v444
    %v446 = vsel %vm445, %v419, 0.0
    %447 = vadd.xlane.f32.xlu0 %v446
    %v448 = vpop.xlane.xlu0 %447
    %vm449 = vcmp.eq.s32.totalorder %v426, 0
    %v450 = vcvt.s32.f32 %v444
    %vm451 = vcmp.eq.s32.totalorder %v426, 1
    %v452 = vsel %vm451, %v448, 0.0
    %v453 = vsel %vm449, %v450, %v452
    %454 = vst [vmem:[%s6] sm:$0xff] %v453
    // Predicated region
    $region26: #{linear_ffnet_forward.1} parent=1 // pred_check
      _
    $region27: #{linear_ffnet_forward.1} parent=1 // pred_check_branch
      %456 = sbr.rel (0) target = $region29
    $region28: #{linear_ffnet_forward.1} parent=1 // pred_region
      _
    $region29: #{linear_ffnet_forward.1} parent=1 // pred_fallthru
      _
    // Predicated region
    $region30: #{linear_ffnet_forward.1} parent=1 // pred_check
      _
    $region31: #{linear_ffnet_forward.1} parent=1 // pred_check_branch
      %458 = sbr.rel (0) target = $region33
    $region32: #{linear_ffnet_forward.1} parent=1 // pred_region
      _
    $region33: #{linear_ffnet_forward.1} parent=1 // pred_fallthru
      _
    // Predicated region
    $region34: #{linear_ffnet_forward.1} parent=1 // pred_check
      _
    $region35: #{linear_ffnet_forward.1} parent=1 // pred_check_branch
      %460 = sbr.rel (0) target = $region37
    $region36: #{linear_ffnet_forward.1} parent=1 // pred_region
      _
    $region37: #{linear_ffnet_forward.1} parent=1 // pred_fallthru
      _
    // Predicated region
    $region38: #{linear_ffnet_forward.1} parent=1 // pred_check
      _
    $region39: #{linear_ffnet_forward.1} parent=1 // pred_check_branch
      %462 = sbr.rel (0) target = $region41
    $region40: #{linear_ffnet_forward.1} parent=1 // pred_region
      _
    $region41: #{linear_ffnet_forward.1} parent=1 // pred_fallthru
      _
    %463 = vsyncpa [#allocation3], 1

</llo_original>
